<compile_context>
chip_gen: v6e
topology: v6e:2x2x1
jax: 0.10.0
libtpu: 0.0.40
codegen_flags: <defaults>
</compile_context>

<pallas_src>
import jax
import jax.numpy as jnp
from jax.experimental import pallas as pl
from jax.experimental.pallas import tpu as pltpu

HIDDEN = 128


def _round_up(x, m):
    return (x + m - 1) // m * m


def _num_tensorcores():
    """TensorCores per chip that a 'parallel' grid axis is sharded across."""
    try:
        kind = jax.devices()[0].device_kind.lower()
    except Exception:
        return 1
    # Single-TC chips: v5e / v6e (Trillium).  Dual-TC (megacore): v4, v5p, v7x.
    if any(t in kind for t in ("v5 lite", "v5lite", "v5e", "v6", "trillium")):
        return 1
    if any(t in kind for t in ("v4", "v5p", "v5 p", "7x", "v7")):
        return 2
    return 1


def qnet_kernel(s_ref, a_ref, w1s_ref, w1a_ref, wh_ref, bh_ref, w5_ref,
                b5_ref, o_ref):
    # fc1: torch.cat([state, action], dim=1) is folded into two matmuls on the
    # row-split weight -- no concatenated array ever hits HBM.
    s = s_ref[...].astype(jnp.bfloat16)
    a = a_ref[...].astype(jnp.bfloat16)
    h = (jnp.dot(s, w1s_ref[...], preferred_element_type=jnp.float32)
         + jnp.dot(a, w1a_ref[...], preferred_element_type=jnp.float32)
         + bh_ref[0:1, :])
    h = jnp.maximum(h, 0.0)

    # fc2..fc4: bf16 MXU matmuls with f32 accumulation; bias + ReLU in f32.
    # Weights live in one stacked (3, 128, 128) bf16 ref, biases in (4, 128).
    for l in range(3):
        h = (jnp.dot(h.astype(jnp.bfloat16), wh_ref[l],
                     preferred_element_type=jnp.float32)
             + bh_ref[l + 1:l + 2, :])
        h = jnp.maximum(h, 0.0)

    # fc5 (128 -> 1): an N=1 matmul would use 1/128-1/256 of the MXU columns;
    # do it on the VPU + XLU instead (multiply by the (1,128) f32 row, then a
    # lane reduction).
    q = jnp.sum(h * w5_ref[...], axis=-1, keepdims=True) + b5_ref[...]
    # TODO(synk): a lane-dense (1, tb) output layout would avoid the masked
    # (tb, 1) stores, but needs an in-kernel relayout; kept (tb, 1) since the
    # output is only tb*4 bytes per step.
    o_ref[...] = q.astype(o_ref.dtype)


def qnet_forward(state, action, params, *, tb=1024):
    """QNet forward. params = [w1,b1,...,w5,b5], w_i stored [in, out]."""
    B, sd = state.shape
    _, ad = action.shape
    w1, b1, w2, b2, w3, b3, w4, b4, w5, b5 = params

    # ---- batch tiling: big tiles amortize the fixed per-grid-step overhead.
    # Only split the batch across grid steps on dual-TC chips (megacore
    # sharding of the "parallel" axis), never below ~512 rows/step. Arbitrary
    # B works: the ragged last block is padded on read (rows never mix) and
    # its out-of-bounds stores are masked.
    B8 = _round_up(B, 8)
    tb_eff = min(tb, B8)
    n_tc = _num_tensorcores()
    if n_tc > 1 and B8 >= 2 * 512:
        steps = min(2 * n_tc, B8 // 512)       # >=2 steps per TC when B allows
        tb_eff = min(tb_eff, _round_up(pl.cdiv(B8, steps), 8))
    grid = pl.cdiv(B, tb_eff)

    # ---- parameter prep (folds away under jit): split w1 into state/action
    # rows (the concat becomes two dots in-kernel), cast matmul weights to
    # bf16 once, pack hidden weights/biases to cut kernel operand count.
    w1s = w1[:sd].astype(jnp.bfloat16)                       # (sd, 128)
    w1a = w1[sd:].astype(jnp.bfloat16)                       # (ad, 128)
    wh = jnp.stack([w2, w3, w4]).astype(jnp.bfloat16)        # (3, 128, 128)
    bh = jnp.concatenate([b1, b2, b3, b4], axis=0)           # (4, 128) f32
    w5_row = w5.reshape(1, HIDDEN)                           # (128,1)->(1,128)

    weights = (w1s, w1a, wh, bh, w5_row, b5)

    def const_spec(p):
        # ~200 KB of parameters total: keep each fully VMEM-resident; the
        # constant index_map means Pallas does not re-fetch them per step.
        if p.ndim == 3:
            return pl.BlockSpec(p.shape, lambda i: (0, 0, 0))
        return pl.BlockSpec(p.shape, lambda i: (0, 0))

    return pl.pallas_call(
        qnet_kernel,
        out_shape=jax.ShapeDtypeStruct((B, 1), jnp.float32),
        grid=(grid,),
        in_specs=[pl.BlockSpec((tb_eff, sd), lambda i: (i, 0)),
                  pl.BlockSpec((tb_eff, ad), lambda i: (i, 0))]
                 + [const_spec(p) for p in weights],
        out_specs=pl.BlockSpec((tb_eff, 1), lambda i: (i, 0)),
        compiler_params=pltpu.CompilerParams(
            dimension_semantics=("parallel",)),
    )(state, action, *weights)


def init_params(key, state_dim, action_dim):
    # Deterministic synthetic init mirroring nn.Linear shapes:
    #   fc1: (state_dim+action_dim, 128), fc2/3/4: (128, 128), fc5: (128, 1)
    dims = [(state_dim + action_dim, HIDDEN), (HIDDEN, HIDDEN),
            (HIDDEN, HIDDEN), (HIDDEN, HIDDEN), (HIDDEN, 1)]
    params = []
    for din, dout in dims:
        kw, kb, key = jax.random.split(key, 3)
        bound = 1.0 / (din ** 0.5)  # same bound as PyTorch's default init
        w = jax.random.uniform(kw, (din, dout), jnp.float32, -bound, bound)
        b = jax.random.uniform(kb, (1, dout), jnp.float32, -bound, bound)
        params += [w, b]
    return params


if __name__ == "__main__":
    key = jax.random.PRNGKey(0)
    k_s, k_a, k_p = jax.random.split(key, 3)
    state_dim, action_dim = 16, 8
    params = init_params(k_p, state_dim, action_dim)

    def ref_fwd(state, action):  # pure-JAX fp32 reference (matches nn.Linear)
        x = jnp.concatenate([state, action], axis=1)
        w1, b1, w2, b2, w3, b3, w4, b4, w5, b5 = params
        h = jnp.maximum(x @ w1 + b1, 0.0)
        h = jnp.maximum(h @ w2 + b2, 0.0)
        h = jnp.maximum(h @ w3 + b3, 0.0)
        h = jnp.maximum(h @ w4 + b4, 0.0)
        return h @ w5 + b5

    fwd = jax.jit(qnet_forward, static_argnames=("tb",))

    # small-shape smoke test (single grid step, batch a multiple of 8)
    B = 8
    state = jax.random.normal(k_s, (B, state_dim), jnp.float32)
    action = jax.random.normal(k_a, (B, action_dim), jnp.float32)
    q = fwd(state, action, params)
    jax.block_until_ready(q)
    assert q.shape == (B, 1)
    # bf16 matmuls vs fp32 reference -> relaxed tolerance
    assert jnp.allclose(q, ref_fwd(state, action), atol=5e-2, rtol=5e-2)

    # ragged batch (not a multiple of 8) exercising the padded last block
    B2 = 300
    state2 = jax.random.normal(k_s, (B2, state_dim), jnp.float32)
    action2 = jax.random.normal(k_a, (B2, action_dim), jnp.float32)
    q2 = fwd(state2, action2, params)
    jax.block_until_ready(q2)
    assert q2.shape == (B2, 1)
    assert jnp.allclose(q2, ref_fwd(state2, action2), atol=5e-2, rtol=5e-2)

    print("KERNEL_OK")
</pallas_src>

<mosaic_0001>
module attributes {stable_mosaic.version = 11 : i64} {
  func.func @qnet_kernel(%arg0: i32, %arg1: memref<8x16xf32, #tpu.memory_space<vmem>>, %arg2: memref<8x8xf32, #tpu.memory_space<vmem>>, %arg3: memref<16x128xbf16, #tpu.memory_space<vmem>>, %arg4: memref<8x128xbf16, #tpu.memory_space<vmem>>, %arg5: memref<3x128x128xbf16, #tpu.memory_space<vmem>>, %arg6: memref<4x128xf32, #tpu.memory_space<vmem>>, %arg7: memref<1x128xf32, #tpu.memory_space<vmem>>, %arg8: memref<1x1xf32, #tpu.memory_space<vmem>>, %arg9: memref<8x1xf32, #tpu.memory_space<vmem>>) attributes {dimension_semantics = [#tpu.dimension_semantics<parallel>], iteration_bounds = array<i64: 1>, scalar_prefetch = 0 : i64, scratch_operands = 0 : i64, tpu.core_type = #tpu.core_type<tc>, window_params = [{transform_indices = @transform_0, window_bounds = array<i64: 8, 16>}, {transform_indices = @transform_1, window_bounds = array<i64: 8, 8>}, {pipeline_mode = #tpu.pipeline_mode<synchronous>, transform_indices = @transform_2, window_bounds = array<i64: 16, 128>}, {pipeline_mode = #tpu.pipeline_mode<synchronous>, transform_indices = @transform_3, window_bounds = array<i64: 8, 128>}, {pipeline_mode = #tpu.pipeline_mode<synchronous>, transform_indices = @transform_4, window_bounds = array<i64: 3, 128, 128>}, {pipeline_mode = #tpu.pipeline_mode<synchronous>, transform_indices = @transform_5, window_bounds = array<i64: 4, 128>}, {pipeline_mode = #tpu.pipeline_mode<synchronous>, transform_indices = @transform_6, window_bounds = array<i64: 1, 128>}, {pipeline_mode = #tpu.pipeline_mode<synchronous>, transform_indices = @transform_7, window_bounds = array<i64: 1, 1>}, {transform_indices = @transform_8, window_bounds = array<i64: 8, 1>}]} {
    %c0 = arith.constant 0 : index
    %c0_0 = arith.constant 0 : index
    %0 = vector.load %arg1[%c0, %c0_0] : memref<8x16xf32, #tpu.memory_space<vmem>>, vector<8x16xf32>
    %1 = arith.truncf %0 : vector<8x16xf32> to vector<8x16xbf16>
    %c0_1 = arith.constant 0 : index
    %c0_2 = arith.constant 0 : index
    %2 = vector.load %arg2[%c0_1, %c0_2] : memref<8x8xf32, #tpu.memory_space<vmem>>, vector<8x8xf32>
    %3 = arith.truncf %2 : vector<8x8xf32> to vector<8x8xbf16>
    %c0_3 = arith.constant 0 : index
    %c0_4 = arith.constant 0 : index
    %4 = vector.load %arg3[%c0_3, %c0_4] : memref<16x128xbf16, #tpu.memory_space<vmem>>, vector<16x128xbf16>
    %cst = arith.constant dense<0.000000e+00> : vector<8x128xf32>
    %5 = tpu.matmul %1, %4, %cst {dimension_numbers = #tpu.dot_dimension_numbers<[1], [0], [0], [1], [0, 0, 1, 1], [], []>} : vector<8x16xbf16>, vector<16x128xbf16>, vector<8x128xf32> -> vector<8x128xf32>
    %c0_5 = arith.constant 0 : index
    %c0_6 = arith.constant 0 : index
    %6 = vector.load %arg4[%c0_5, %c0_6] : memref<8x128xbf16, #tpu.memory_space<vmem>>, vector<8x128xbf16>
    %cst_7 = arith.constant dense<0.000000e+00> : vector<8x128xf32>
    %7 = tpu.matmul %3, %6, %cst_7 {dimension_numbers = #tpu.dot_dimension_numbers<[1], [0], [0], [1], [0, 0, 1, 1], [], []>} : vector<8x8xbf16>, vector<8x128xbf16>, vector<8x128xf32> -> vector<8x128xf32>
    %8 = arith.addf %5, %7 : vector<8x128xf32>
    %c0_8 = arith.constant 0 : index
    %c0_9 = arith.constant 0 : index
    %9 = vector.load %arg6[%c0_8, %c0_9] : memref<4x128xf32, #tpu.memory_space<vmem>>, vector<1x128xf32>
    %10 = vector.broadcast %9 : vector<1x128xf32> to vector<8x128xf32>
    %11 = arith.addf %8, %10 : vector<8x128xf32>
    %cst_10 = arith.constant 0.000000e+00 : f32
    %12 = vector.broadcast %cst_10 : f32 to vector<8x128xf32>
    %13 = arith.maximumf %11, %12 : vector<8x128xf32>
    %14 = arith.truncf %13 : vector<8x128xf32> to vector<8x128xbf16>
    %c0_11 = arith.constant 0 : index
    %c0_12 = arith.constant 0 : index
    %c0_13 = arith.constant 0 : index
    %15 = vector.load %arg5[%c0_11, %c0_12, %c0_13] : memref<3x128x128xbf16, #tpu.memory_space<vmem>>, vector<1x128x128xbf16>
    %16 = vector.shape_cast %15 : vector<1x128x128xbf16> to vector<128x128xbf16>
    %cst_14 = arith.constant dense<0.000000e+00> : vector<8x128xf32>
    %17 = tpu.matmul %14, %16, %cst_14 {dimension_numbers = #tpu.dot_dimension_numbers<[1], [0], [0], [1], [0, 0, 1, 1], [], []>} : vector<8x128xbf16>, vector<128x128xbf16>, vector<8x128xf32> -> vector<8x128xf32>
    %c1 = arith.constant 1 : index
    %c0_15 = arith.constant 0 : index
    %18 = vector.load %arg6[%c1, %c0_15] : memref<4x128xf32, #tpu.memory_space<vmem>>, vector<1x128xf32>
    %19 = vector.broadcast %18 : vector<1x128xf32> to vector<8x128xf32>
    %20 = arith.addf %17, %19 : vector<8x128xf32>
    %cst_16 = arith.constant 0.000000e+00 : f32
    %21 = vector.broadcast %cst_16 : f32 to vector<8x128xf32>
    %22 = arith.maximumf %20, %21 : vector<8x128xf32>
    %23 = arith.truncf %22 : vector<8x128xf32> to vector<8x128xbf16>
    %c1_17 = arith.constant 1 : index
    %c0_18 = arith.constant 0 : index
    %c0_19 = arith.constant 0 : index
    %24 = vector.load %arg5[%c1_17, %c0_18, %c0_19] : memref<3x128x128xbf16, #tpu.memory_space<vmem>>, vector<1x128x128xbf16>
    %25 = vector.shape_cast %24 : vector<1x128x128xbf16> to vector<128x128xbf16>
    %cst_20 = arith.constant dense<0.000000e+00> : vector<8x128xf32>
    %26 = tpu.matmul %23, %25, %cst_20 {dimension_numbers = #tpu.dot_dimension_numbers<[1], [0], [0], [1], [0, 0, 1, 1], [], []>} : vector<8x128xbf16>, vector<128x128xbf16>, vector<8x128xf32> -> vector<8x128xf32>
    %c2 = arith.constant 2 : index
    %c0_21 = arith.constant 0 : index
    %27 = vector.load %arg6[%c2, %c0_21] : memref<4x128xf32, #tpu.memory_space<vmem>>, vector<1x128xf32>
    %28 = vector.broadcast %27 : vector<1x128xf32> to vector<8x128xf32>
    %29 = arith.addf %26, %28 : vector<8x128xf32>
    %cst_22 = arith.constant 0.000000e+00 : f32
    %30 = vector.broadcast %cst_22 : f32 to vector<8x128xf32>
    %31 = arith.maximumf %29, %30 : vector<8x128xf32>
    %32 = arith.truncf %31 : vector<8x128xf32> to vector<8x128xbf16>
    %c2_23 = arith.constant 2 : index
    %c0_24 = arith.constant 0 : index
    %c0_25 = arith.constant 0 : index
    %33 = vector.load %arg5[%c2_23, %c0_24, %c0_25] : memref<3x128x128xbf16, #tpu.memory_space<vmem>>, vector<1x128x128xbf16>
    %34 = vector.shape_cast %33 : vector<1x128x128xbf16> to vector<128x128xbf16>
    %cst_26 = arith.constant dense<0.000000e+00> : vector<8x128xf32>
    %35 = tpu.matmul %32, %34, %cst_26 {dimension_numbers = #tpu.dot_dimension_numbers<[1], [0], [0], [1], [0, 0, 1, 1], [], []>} : vector<8x128xbf16>, vector<128x128xbf16>, vector<8x128xf32> -> vector<8x128xf32>
    %c3 = arith.constant 3 : index
    %c0_27 = arith.constant 0 : index
    %36 = vector.load %arg6[%c3, %c0_27] : memref<4x128xf32, #tpu.memory_space<vmem>>, vector<1x128xf32>
    %37 = vector.broadcast %36 : vector<1x128xf32> to vector<8x128xf32>
    %38 = arith.addf %35, %37 : vector<8x128xf32>
    %cst_28 = arith.constant 0.000000e+00 : f32
    %39 = vector.broadcast %cst_28 : f32 to vector<8x128xf32>
    %40 = arith.maximumf %38, %39 : vector<8x128xf32>
    %c0_29 = arith.constant 0 : index
    %c0_30 = arith.constant 0 : index
    %41 = vector.load %arg7[%c0_29, %c0_30] : memref<1x128xf32, #tpu.memory_space<vmem>>, vector<1x128xf32>
    %42 = vector.broadcast %41 : vector<1x128xf32> to vector<8x128xf32>
    %43 = arith.mulf %40, %42 : vector<8x128xf32>
    %cst_31 = arith.constant dense<0.000000e+00> : vector<8xf32>
    %44 = vector.multi_reduction <add>, %43, %cst_31 [1] : vector<8x128xf32> to vector<8xf32>
    %45 = vector.shape_cast %44 : vector<8xf32> to vector<8x1xf32>
    %c0_32 = arith.constant 0 : index
    %c0_33 = arith.constant 0 : index
    %46 = vector.load %arg8[%c0_32, %c0_33] : memref<1x1xf32, #tpu.memory_space<vmem>>, vector<1x1xf32>
    %47 = vector.broadcast %46 : vector<1x1xf32> to vector<8x1xf32>
    %48 = arith.addf %45, %47 : vector<8x1xf32>
    %c0_34 = arith.constant 0 : index
    %c0_35 = arith.constant 0 : index
    %49 = vector.load %arg9[%c0_34, %c0_35] : memref<8x1xf32, #tpu.memory_space<vmem>>, vector<8x1xf32>
    tpu.vector_store %arg9[%c0_34, %c0_35], %48 {strides = array<i32>} : memref<8x1xf32, #tpu.memory_space<vmem>>, vector<8x1xf32>,
    return
  }
  func.func @transform_0(%arg0: i32) -> (i32, i32) {
    %c0_i32 = arith.constant 0 : i32
    %c0_i32_0 = arith.constant 0 : i32
    return %arg0, %c0_i32 : i32, i32
  }
  func.func @transform_1(%arg0: i32) -> (i32, i32) {
    %c0_i32 = arith.constant 0 : i32
    %c0_i32_0 = arith.constant 0 : i32
    return %arg0, %c0_i32 : i32, i32
  }
  func.func @transform_2(%arg0: i32) -> (i32, i32) {
    %c0_i32 = arith.constant 0 : i32
    %c0_i32_0 = arith.constant 0 : i32
    %c0_i32_1 = arith.constant 0 : i32
    return %c0_i32, %c0_i32_0 : i32, i32
  }
  func.func @transform_3(%arg0: i32) -> (i32, i32) {
    %c0_i32 = arith.constant 0 : i32
    %c0_i32_0 = arith.constant 0 : i32
    %c0_i32_1 = arith.constant 0 : i32
    return %c0_i32, %c0_i32_0 : i32, i32
  }
  func.func @transform_4(%arg0: i32) -> (i32, i32, i32) {
    %c0_i32 = arith.constant 0 : i32
    %c0_i32_0 = arith.constant 0 : i32
    %c0_i32_1 = arith.constant 0 : i32
    %c0_i32_2 = arith.constant 0 : i32
    return %c0_i32, %c0_i32_0, %c0_i32_1 : i32, i32, i32
  }
  func.func @transform_5(%arg0: i32) -> (i32, i32) {
    %c0_i32 = arith.constant 0 : i32
    %c0_i32_0 = arith.constant 0 : i32
    %c0_i32_1 = arith.constant 0 : i32
    return %c0_i32, %c0_i32_0 : i32, i32
  }
  func.func @transform_6(%arg0: i32) -> (i32, i32) {
    %c0_i32 = arith.constant 0 : i32
    %c0_i32_0 = arith.constant 0 : i32
    %c0_i32_1 = arith.constant 0 : i32
    return %c0_i32, %c0_i32_0 : i32, i32
  }
  func.func @transform_7(%arg0: i32) -> (i32, i32) {
    %c0_i32 = arith.constant 0 : i32
    %c0_i32_0 = arith.constant 0 : i32
    %c0_i32_1 = arith.constant 0 : i32
    return %c0_i32, %c0_i32_0 : i32, i32
  }
  func.func @transform_8(%arg0: i32) -> (i32, i32) {
    %c0_i32 = arith.constant 0 : i32
    %c0_i32_0 = arith.constant 0 : i32
    return %arg0, %c0_i32 : i32, i32
  }
}

</mosaic_0001>

<llo_original>
// kernel: qnet_forward.1
$region0: #{qnet_forward.1}
  #allocation0 [shape = 'u32[]', space=smem, size = 0x4, offset = 0x4, fixed_abs, tag = 'smem constant byte address 0x4 - core index']
  #allocation1 [shape = 'u32[144,128]{1,0:T(1,128)}', space=vmem, size = 0x12000, scoped, tag = 'internal scratch']
  #allocation2 [shape = 'f32[1,1]{1,0:T(1,128)S(1)}', space=vmem, size = 0x200, scoped, tag = 'scoped memory for qnet_forward.1']
  %s0 = inlined_call_operand.vmem [shape: f32[8,16], index: 0, kind: input, shape index: {}]
  %s1 = inlined_call_operand.vmem [shape: f32[8,8], index: 1, kind: input, shape index: {}]
  %s2 = inlined_call_operand.vmem [shape: bf16[16,128], index: 2, kind: input, shape index: {}]
  %s3 = inlined_call_operand.vmem [shape: bf16[8,128], index: 3, kind: input, shape index: {}]
  %s4 = inlined_call_operand.vmem [shape: bf16[3,128,128], index: 4, kind: input, shape index: {}]
  %s5 = inlined_call_operand.vmem [shape: f32[4,128], index: 5, kind: input, shape index: {}]
  %s6 = inlined_call_operand.vmem [shape: f32[1,128], index: 6, kind: input, shape index: {}]
  %s7 = inlined_call_operand.<no memory space> [shape: f32[1,1], index: 7, kind: input, shape index: {}]
  %s8 = inlined_call_operand.vmem [shape: f32[8,1], index: 8, kind: output, shape index: {}]
  %s9 = sld [smem:[#allocation0]]
  $region42: #{qnet_forward.1} parent=0
    _
  %s11 = ssub.s32 1, %s9
  %s12 = scalar_select 0, %s11, %s9
  %v13 = vstv %s7
  %14 = vst [vmem:[#allocation2] sm:$0x1] %v13
  // Predicated region
  $region2: #{qnet_forward.1} parent=0 // pred_check
    _
  $region3: #{qnet_forward.1} parent=0 // pred_check_branch
    %16 = sbr.rel (0) target = $region5
  $region4: #{qnet_forward.1} parent=0 // pred_region
    _
  $region5: #{qnet_forward.1} parent=0 // pred_fallthru
    _
  // Predicated region
  $region6: #{qnet_forward.1} parent=0 // pred_check
    _
  $region7: #{qnet_forward.1} parent=0 // pred_check_branch
    %18 = sbr.rel (0) target = $region9
  $region8: #{qnet_forward.1} parent=0 // pred_region
    _
  $region9: #{qnet_forward.1} parent=0 // pred_fallthru
    _
  // Predicated region
  $region10: #{qnet_forward.1} parent=0 // pred_check
    _
  $region11: #{qnet_forward.1} parent=0 // pred_check_branch
    %20 = sbr.rel (0) target = $region13
  $region12: #{qnet_forward.1} parent=0 // pred_region
    _
  $region13: #{qnet_forward.1} parent=0 // pred_fallthru
    _
  // Predicated region
  $region14: #{qnet_forward.1} parent=0 // pred_check
    _
  $region15: #{qnet_forward.1} parent=0 // pred_check_branch
    %22 = sbr.rel (0) target = $region17
  $region16: #{qnet_forward.1} parent=0 // pred_region
    _
  $region17: #{qnet_forward.1} parent=0 // pred_fallthru
    _
  // Predicated region
  $region18: #{qnet_forward.1} parent=0 // pred_check
    _
  $region19: #{qnet_forward.1} parent=0 // pred_check_branch
    %24 = sbr.rel (0) target = $region21
  $region20: #{qnet_forward.1} parent=0 // pred_region
    _
  $region21: #{qnet_forward.1} parent=0 // pred_fallthru
    _
  // Predicated region
  $region22: #{qnet_forward.1} parent=0 // pred_check
    _
  $region23: #{qnet_forward.1} parent=0 // pred_check_branch
    %26 = sbr.rel (0) target = $region25
  $region24: #{qnet_forward.1} parent=0 // pred_region
    _
  $region25: #{qnet_forward.1} parent=0 // pred_fallthru
    _
  // Predicated region
  $region26: #{qnet_forward.1} parent=0 // pred_check
    _
  $region27: #{qnet_forward.1} parent=0 // pred_check_branch
    %28 = sbr.rel (0) target = $region29
  $region28: #{qnet_forward.1} parent=0 // pred_region
    _
  $region29: #{qnet_forward.1} parent=0 // pred_fallthru
    _
  // Predicated region
  $region30: #{qnet_forward.1} parent=0 // pred_check
    _
  $region31: #{qnet_forward.1} parent=0 // pred_check_branch
    %30 = sbr.rel (0) target = $region33
  $region32: #{qnet_forward.1} parent=0 // pred_region
    _
  $region33: #{qnet_forward.1} parent=0 // pred_fallthru
    _
  %v32 = vld [vmem:[%s0] sm:$0xff]
  %v33 = vpack.c.bf16 %v32, %v32
  %v34 = vld [vmem:[%s1] sm:$0xff]
  %v35 = vpack.c.bf16 %v34, %v34
  %v36 = vld [vmem:[%s2] sm:$0xf]
  %v37 = vld [vmem:[%s2 + $0x4] sm:$0xf]
  %v38 = vld [vmem:[%s3] sm:$0xf]
  %vm39 = vcmask 64512
  %v41 = vsel %vm39, %v35, 0
  %vm43 = vcmask 1043456
  %v45 = vsel %vm43, %v38, 0
  %47 = vmatprep.subr.bf16.mxu0 0
  %48 = vmatpush1.bf16.msra.mxu0 0
  %49 = vmatprep.subr.bf16.mxu0 0
  %50 = vmatpush1.bf16.msra.mxu0 0
  %51 = vmatprep.subr.bf16.mxu0 0
  %52 = vmatpush1.bf16.msra.mxu0 0
  %53 = vmatprep.subr.bf16.mxu0 0
  %54 = vmatpush1.bf16.msra.mxu0 0
  %55 = vmatprep.subr.bf16.mxu0 0
  %56 = vmatpush1.bf16.msra.mxu0 0
  %57 = vmatprep.subr.bf16.mxu0 0
  %58 = vmatpush1.bf16.msra.mxu0 0
  %59 = vmatprep.subr.bf16.mxu0 0
  %60 = vmatpush1.bf16.msra.mxu0 0
  %61 = vmatprep.subr.bf16.mxu0 0
  %62 = vmatpush1.bf16.msra.mxu0 %v45
  %63 = vmatprep.subr.bf16.mxu0 0
  %64 = vmatpush2.bf16.msra.mxu0 0
  %65 = vmatprep.subr.bf16.mxu0 0
  %66 = vmatpush2.bf16.msra.mxu0 0
  %67 = vmatprep.subr.bf16.mxu0 0
  %68 = vmatpush2.bf16.msra.mxu0 0
  %69 = vmatprep.subr.bf16.mxu0 0
  %70 = vmatpush2.bf16.msra.mxu0 0
  %71 = vmatprep.subr.bf16.mxu0 0
  %72 = vmatpush2.bf16.msra.mxu0 0
  %73 = vmatprep.subr.bf16.mxu0 0
  %74 = vmatpush2.bf16.msra.mxu0 0
  %75 = vmatprep.subr.bf16.mxu0 0
  %76 = vmatpush2.bf16.msra.mxu0 0
  %77 = vmatprep.subr.bf16.mxu0 0
  %78 = vmatpush2.bf16.msra.mxu0 0
  %79 = vmatprep.mubr.bf16.mxu0 0
  %80 = vmatmul.mubr.bf16.gmra.mxu0 %v41
  %v81 = vpop.f32.mrf.mxu0
  %v82 = vadd.f32 0.0, %v81
  %v83 = vpop.f32.mrf.mxu0
  %v84 = vpop.f32.mrf.mxu0
  %v85 = vpop.f32.mrf.mxu0
  %86 = vdwg.mxu0
  %v89 = vunpack.c.l.b16 %v36
  %v90 = vunpack.c.l.b16 %v37
  %v91 = vpack.c.b16 %v90, %v89
  %vm93 = vcmask 130048
  %v95 = vsel %vm93, %v33, 0
  %97 = vmatprep.subr.bf16.mxu0 0
  %98 = vmatpush1.bf16.msra.mxu0 0
  %99 = vmatprep.subr.bf16.mxu0 0
  %100 = vmatpush1.bf16.msra.mxu0 0
  %101 = vmatprep.subr.bf16.mxu0 0
  %102 = vmatpush1.bf16.msra.mxu0 0
  %103 = vmatprep.subr.bf16.mxu0 0
  %104 = vmatpush1.bf16.msra.mxu0 0
  %105 = vmatprep.subr.bf16.mxu0 0
  %106 = vmatpush1.bf16.msra.mxu0 0
  %107 = vmatprep.subr.bf16.mxu0 0
  %108 = vmatpush1.bf16.msra.mxu0 0
  %109 = vmatprep.subr.bf16.mxu0 0
  %110 = vmatpush1.bf16.msra.mxu0 0
  %111 = vmatprep.subr.bf16.mxu0 0
  %112 = vmatpush1.bf16.msra.mxu0 %v91
  %113 = vmatprep.subr.bf16.mxu0 0
  %114 = vmatpush2.bf16.msra.mxu0 0
  %115 = vmatprep.subr.bf16.mxu0 0
  %116 = vmatpush2.bf16.msra.mxu0 0
  %117 = vmatprep.subr.bf16.mxu0 0
  %118 = vmatpush2.bf16.msra.mxu0 0
  %119 = vmatprep.subr.bf16.mxu0 0
  %120 = vmatpush2.bf16.msra.mxu0 0
  %121 = vmatprep.subr.bf16.mxu0 0
  %122 = vmatpush2.bf16.msra.mxu0 0
  %123 = vmatprep.subr.bf16.mxu0 0
  %124 = vmatpush2.bf16.msra.mxu0 0
  %125 = vmatprep.subr.bf16.mxu0 0
  %126 = vmatpush2.bf16.msra.mxu0 0
  %127 = vmatprep.subr.bf16.mxu0 0
  %128 = vmatpush2.bf16.msra.mxu0 0
  %129 = vmatprep.mubr.bf16.mxu0 0
  %130 = vmatmul.mubr.bf16.gmra.mxu0 %v95
  %v131 = vpop.f32.mrf.mxu0
  %v132 = vadd.f32 %v82, %v131
  %v133 = vpop.f32.mrf.mxu0
  %v134 = vpop.f32.mrf.mxu0
  %v135 = vpop.f32.mrf.mxu0
  %136 = vdwg.mxu0
  %v137 = vld [vmem:[%s5] sm:$0x1]
  %v138 = vlaneseq
  %v139 = vshrl.u32 %v138, 7
  %v140 = vsub.s32 0, %v139
  %v141 = vrot.slane %v137, %v140
  %v142 = vadd.f32 %v132, %v141
  %v143 = vmax.f32 %v142, 0.0
  %v144 = vpack.c.bf16 %v143, %v143
  %v145 = vld [vmem:[%s4] sm:$0xf]
  %v146 = vld [vmem:[%s4 + $0x4] sm:$0xf]
  %v147 = vld [vmem:[%s4 + $0x8] sm:$0xf]
  %v148 = vld [vmem:[%s4 + $0xc] sm:$0xf]
  %v149 = vld [vmem:[%s4 + $0x10] sm:$0xf]
  %v150 = vld [vmem:[%s4 + $0x14] sm:$0xf]
  %v151 = vld [vmem:[%s4 + $0x18] sm:$0xf]
  %v152 = vld [vmem:[%s4 + $0x1c] sm:$0xf]
  %v153 = vld [vmem:[%s4 + $0x20] sm:$0xf]
  %v154 = vld [vmem:[%s4 + $0x24] sm:$0xf]
  %v155 = vld [vmem:[%s4 + $0x28] sm:$0xf]
  %v156 = vld [vmem:[%s4 + $0x2c] sm:$0xf]
  %v157 = vld [vmem:[%s4 + $0x30] sm:$0xf]
  %v158 = vld [vmem:[%s4 + $0x34] sm:$0xf]
  %v159 = vld [vmem:[%s4 + $0x38] sm:$0xf]
  %v160 = vld [vmem:[%s4 + $0x3c] sm:$0xf]
  %v161 = vld [vmem:[%s5 + $0x1] sm:$0x1]
  %v162 = vlaneseq
  %v163 = vshrl.u32 %v162, 7
  %v164 = vsub.s32 0, %v163
  %v165 = vrot.slane %v161, %v164
  %v182 = vunpack.c.l.b16 %v145
  %v183 = vunpack.c.l.b16 %v146
  %v184 = vunpack.c.l.b16 %v147
  %v185 = vunpack.c.l.b16 %v148
  %v186 = vunpack.c.l.b16 %v149
  %v187 = vunpack.c.l.b16 %v150
  %v188 = vunpack.c.l.b16 %v151
  %v189 = vunpack.c.l.b16 %v152
  %v190 = vunpack.c.l.b16 %v153
  %v191 = vunpack.c.l.b16 %v154
  %v192 = vunpack.c.l.b16 %v155
  %v193 = vunpack.c.l.b16 %v156
  %v194 = vunpack.c.l.b16 %v157
  %v195 = vunpack.c.l.b16 %v158
  %v196 = vunpack.c.l.b16 %v159
  %v197 = vunpack.c.l.b16 %v160
  %v198 = vpack.c.b16 %v183, %v182
  %v199 = vpack.c.b16 %v185, %v184
  %v200 = vpack.c.b16 %v187, %v186
  %v201 = vpack.c.b16 %v189, %v188
  %v202 = vpack.c.b16 %v191, %v190
  %v203 = vpack.c.b16 %v193, %v192
  %v204 = vpack.c.b16 %v195, %v194
  %v205 = vpack.c.b16 %v197, %v196
  %214 = vmatprep.subr.bf16.mxu0 0
  %215 = vmatpush1.bf16.msra.mxu0 %v205
  %216 = vmatprep.subr.bf16.mxu0 0
  %217 = vmatpush1.bf16.msra.mxu0 %v204
  %218 = vmatprep.subr.bf16.mxu0 0
  %219 = vmatpush1.bf16.msra.mxu0 %v203
  %220 = vmatprep.subr.bf16.mxu0 0
  %221 = vmatpush1.bf16.msra.mxu0 %v202
  %222 = vmatprep.subr.bf16.mxu0 0
  %223 = vmatpush1.bf16.msra.mxu0 %v201
  %224 = vmatprep.subr.bf16.mxu0 0
  %225 = vmatpush1.bf16.msra.mxu0 %v200
  %226 = vmatprep.subr.bf16.mxu0 0
  %227 = vmatpush1.bf16.msra.mxu0 %v199
  %228 = vmatprep.subr.bf16.mxu0 0
  %229 = vmatpush1.bf16.msra.mxu0 %v198
  %230 = vmatprep.subr.bf16.mxu0 0
  %231 = vmatpush2.bf16.msra.mxu0 0
  %232 = vmatprep.subr.bf16.mxu0 0
  %233 = vmatpush2.bf16.msra.mxu0 0
  %234 = vmatprep.subr.bf16.mxu0 0
  %235 = vmatpush2.bf16.msra.mxu0 0
  %236 = vmatprep.subr.bf16.mxu0 0
  %237 = vmatpush2.bf16.msra.mxu0 0
  %238 = vmatprep.subr.bf16.mxu0 0
  %239 = vmatpush2.bf16.msra.mxu0 0
  %240 = vmatprep.subr.bf16.mxu0 0
  %241 = vmatpush2.bf16.msra.mxu0 0
  %242 = vmatprep.subr.bf16.mxu0 0
  %243 = vmatpush2.bf16.msra.mxu0 0
  %244 = vmatprep.subr.bf16.mxu0 0
  %245 = vmatpush2.bf16.msra.mxu0 0
  %246 = vmatprep.mubr.bf16.mxu0 0
  %247 = vmatmul.mubr.bf16.gmra.mxu0 %v144
  %v248 = vpop.f32.mrf.mxu0
  %v249 = vadd.f32 %v165, %v248
  %v250 = vpop.f32.mrf.mxu0
  %v251 = vpop.f32.mrf.mxu0
  %v252 = vpop.f32.mrf.mxu0
  %253 = vdwg.mxu0
  %v254 = vmax.f32 %v249, 0.0
  %v255 = vpack.c.bf16 %v254, %v254
  %s256 = scalar_lea.vmem %s4, 64
  %v257 = vld [vmem:[%s256] sm:$0xf]
  %v258 = vld [vmem:[%s256 + $0x4] sm:$0xf]
  %v259 = vld [vmem:[%s256 + $0x8] sm:$0xf]
  %v260 = vld [vmem:[%s256 + $0xc] sm:$0xf]
  %v261 = vld [vmem:[%s256 + $0x10] sm:$0xf]
  %v262 = vld [vmem:[%s256 + $0x14] sm:$0xf]
  %v263 = vld [vmem:[%s256 + $0x18] sm:$0xf]
  %v264 = vld [vmem:[%s256 + $0x1c] sm:$0xf]
  %v265 = vld [vmem:[%s256 + $0x20] sm:$0xf]
  %v266 = vld [vmem:[%s256 + $0x24] sm:$0xf]
  %v267 = vld [vmem:[%s256 + $0x28] sm:$0xf]
  %v268 = vld [vmem:[%s256 + $0x2c] sm:$0xf]
  %v269 = vld [vmem:[%s256 + $0x30] sm:$0xf]
  %v270 = vld [vmem:[%s256 + $0x34] sm:$0xf]
  %v271 = vld [vmem:[%s256 + $0x38] sm:$0xf]
  %v272 = vld [vmem:[%s256 + $0x3c] sm:$0xf]
  %v273 = vld [vmem:[%s5 + $0x2] sm:$0x1]
  %v274 = vlaneseq
  %v275 = vshrl.u32 %v274, 7
  %v276 = vsub.s32 0, %v275
  %v277 = vrot.slane %v273, %v276
  %v294 = vunpack.c.l.b16 %v257
  %v295 = vunpack.c.l.b16 %v258
  %v296 = vunpack.c.l.b16 %v259
  %v297 = vunpack.c.l.b16 %v260
  %v298 = vunpack.c.l.b16 %v261
  %v299 = vunpack.c.l.b16 %v262
  %v300 = vunpack.c.l.b16 %v263
  %v301 = vunpack.c.l.b16 %v264
  %v302 = vunpack.c.l.b16 %v265
  %v303 = vunpack.c.l.b16 %v266
  %v304 = vunpack.c.l.b16 %v267
  %v305 = vunpack.c.l.b16 %v268
  %v306 = vunpack.c.l.b16 %v269
  %v307 = vunpack.c.l.b16 %v270
  %v308 = vunpack.c.l.b16 %v271
  %v309 = vunpack.c.l.b16 %v272
  %v310 = vpack.c.b16 %v295, %v294
  %v311 = vpack.c.b16 %v297, %v296
  %v312 = vpack.c.b16 %v299, %v298
  %v313 = vpack.c.b16 %v301, %v300
  %v314 = vpack.c.b16 %v303, %v302
  %v315 = vpack.c.b16 %v305, %v304
  %v316 = vpack.c.b16 %v307, %v306
  %v317 = vpack.c.b16 %v309, %v308
  %326 = vmatprep.subr.bf16.mxu0 0
  %327 = vmatpush1.bf16.msra.mxu0 %v317
  %328 = vmatprep.subr.bf16.mxu0 0
  %329 = vmatpush1.bf16.msra.mxu0 %v316
  %330 = vmatprep.subr.bf16.mxu0 0
  %331 = vmatpush1.bf16.msra.mxu0 %v315
  %332 = vmatprep.subr.bf16.mxu0 0
  %333 = vmatpush1.bf16.msra.mxu0 %v314
  %334 = vmatprep.subr.bf16.mxu0 0
  %335 = vmatpush1.bf16.msra.mxu0 %v313
  %336 = vmatprep.subr.bf16.mxu0 0
  %337 = vmatpush1.bf16.msra.mxu0 %v312
  %338 = vmatprep.subr.bf16.mxu0 0
  %339 = vmatpush1.bf16.msra.mxu0 %v311
  %340 = vmatprep.subr.bf16.mxu0 0
  %341 = vmatpush1.bf16.msra.mxu0 %v310
  %342 = vmatprep.subr.bf16.mxu0 0
  %343 = vmatpush2.bf16.msra.mxu0 0
  %344 = vmatprep.subr.bf16.mxu0 0
  %345 = vmatpush2.bf16.msra.mxu0 0
  %346 = vmatprep.subr.bf16.mxu0 0
  %347 = vmatpush2.bf16.msra.mxu0 0
  %348 = vmatprep.subr.bf16.mxu0 0
  %349 = vmatpush2.bf16.msra.mxu0 0
  %350 = vmatprep.subr.bf16.mxu0 0
  %351 = vmatpush2.bf16.msra.mxu0 0
  %352 = vmatprep.subr.bf16.mxu0 0
  %353 = vmatpush2.bf16.msra.mxu0 0
  %354 = vmatprep.subr.bf16.mxu0 0
  %355 = vmatpush2.bf16.msra.mxu0 0
  %356 = vmatprep.subr.bf16.mxu0 0
  %357 = vmatpush2.bf16.msra.mxu0 0
  %358 = vmatprep.mubr.bf16.mxu0 0
  %359 = vmatmul.mubr.bf16.gmra.mxu0 %v255
  %v360 = vpop.f32.mrf.mxu0
  %v361 = vadd.f32 %v277, %v360
  %v362 = vpop.f32.mrf.mxu0
  %v363 = vpop.f32.mrf.mxu0
  %v364 = vpop.f32.mrf.mxu0
  %365 = vdwg.mxu0
  %v366 = vmax.f32 %v361, 0.0
  %v367 = vpack.c.bf16 %v366, %v366
  %s368 = scalar_lea.vmem %s4, 128
  %v369 = vld [vmem:[%s368] sm:$0xf]
  %v370 = vld [vmem:[%s368 + $0x4] sm:$0xf]
  %v371 = vld [vmem:[%s368 + $0x8] sm:$0xf]
  %v372 = vld [vmem:[%s368 + $0xc] sm:$0xf]
  %v373 = vld [vmem:[%s368 + $0x10] sm:$0xf]
  %v374 = vld [vmem:[%s368 + $0x14] sm:$0xf]
  %v375 = vld [vmem:[%s368 + $0x18] sm:$0xf]
  %v376 = vld [vmem:[%s368 + $0x1c] sm:$0xf]
  %v377 = vld [vmem:[%s368 + $0x20] sm:$0xf]
  %v378 = vld [vmem:[%s368 + $0x24] sm:$0xf]
  %v379 = vld [vmem:[%s368 + $0x28] sm:$0xf]
  %v380 = vld [vmem:[%s368 + $0x2c] sm:$0xf]
  %v381 = vld [vmem:[%s368 + $0x30] sm:$0xf]
  %v382 = vld [vmem:[%s368 + $0x34] sm:$0xf]
  %v383 = vld [vmem:[%s368 + $0x38] sm:$0xf]
  %v384 = vld [vmem:[%s368 + $0x3c] sm:$0xf]
  %v385 = vld [vmem:[%s5 + $0x3] sm:$0x1]
  %v386 = vlaneseq
  %v387 = vshrl.u32 %v386, 7
  %v388 = vsub.s32 0, %v387
  %v389 = vrot.slane %v385, %v388
  %v406 = vunpack.c.l.b16 %v369
  %v407 = vunpack.c.l.b16 %v370
  %v408 = vunpack.c.l.b16 %v371
  %v409 = vunpack.c.l.b16 %v372
  %v410 = vunpack.c.l.b16 %v373
  %v411 = vunpack.c.l.b16 %v374
  %v412 = vunpack.c.l.b16 %v375
  %v413 = vunpack.c.l.b16 %v376
  %v414 = vunpack.c.l.b16 %v377
  %v415 = vunpack.c.l.b16 %v378
  %v416 = vunpack.c.l.b16 %v379
  %v417 = vunpack.c.l.b16 %v380
  %v418 = vunpack.c.l.b16 %v381
  %v419 = vunpack.c.l.b16 %v382
  %v420 = vunpack.c.l.b16 %v383
  %v421 = vunpack.c.l.b16 %v384
  %v422 = vpack.c.b16 %v407, %v406
  %v423 = vpack.c.b16 %v409, %v408
  %v424 = vpack.c.b16 %v411, %v410
  %v425 = vpack.c.b16 %v413, %v412
  %v426 = vpack.c.b16 %v415, %v414
  %v427 = vpack.c.b16 %v417, %v416
  %v428 = vpack.c.b16 %v419, %v418
  %v429 = vpack.c.b16 %v421, %v420
  %438 = vmatprep.subr.bf16.mxu0 0
  %439 = vmatpush1.bf16.msra.mxu0 %v429
  %440 = vmatprep.subr.bf16.mxu0 0
  %441 = vmatpush1.bf16.msra.mxu0 %v428
  %442 = vmatprep.subr.bf16.mxu0 0
  %443 = vmatpush1.bf16.msra.mxu0 %v427
  %444 = vmatprep.subr.bf16.mxu0 0
  %445 = vmatpush1.bf16.msra.mxu0 %v426
  %446 = vmatprep.subr.bf16.mxu0 0
  %447 = vmatpush1.bf16.msra.mxu0 %v425
  %448 = vmatprep.subr.bf16.mxu0 0
  %449 = vmatpush1.bf16.msra.mxu0 %v424
  %450 = vmatprep.subr.bf16.mxu0 0
  %451 = vmatpush1.bf16.msra.mxu0 %v423
  %452 = vmatprep.subr.bf16.mxu0 0
  %453 = vmatpush1.bf16.msra.mxu0 %v422
  %454 = vmatprep.subr.bf16.mxu0 0
  %455 = vmatpush2.bf16.msra.mxu0 0
  %456 = vmatprep.subr.bf16.mxu0 0
  %457 = vmatpush2.bf16.msra.mxu0 0
  %458 = vmatprep.subr.bf16.mxu0 0
  %459 = vmatpush2.bf16.msra.mxu0 0
  %460 = vmatprep.subr.bf16.mxu0 0
  %461 = vmatpush2.bf16.msra.mxu0 0
  %462 = vmatprep.subr.bf16.mxu0 0
  %463 = vmatpush2.bf16.msra.mxu0 0
  %464 = vmatprep.subr.bf16.mxu0 0
  %465 = vmatpush2.bf16.msra.mxu0 0
  %466 = vmatprep.subr.bf16.mxu0 0
  %467 = vmatpush2.bf16.msra.mxu0 0
  %468 = vmatprep.subr.bf16.mxu0 0
  %469 = vmatpush2.bf16.msra.mxu0 0
  %470 = vmatprep.mubr.bf16.mxu0 0
  %471 = vmatmul.mubr.bf16.gmra.mxu0 %v367
  %v472 = vpop.f32.mrf.mxu0
  %v473 = vadd.f32 %v389, %v472
  %v474 = vpop.f32.mrf.mxu0
  %v475 = vpop.f32.mrf.mxu0
  %v476 = vpop.f32.mrf.mxu0
  %477 = vdwg.mxu0
  %v478 = vmax.f32 %v473, 0.0
  %v479 = vld [vmem:[%s6] sm:$0x1]
  %v481 = vlaneseq
  %v482 = vshrl.u32 %v481, 7
  %v483 = vsub.s32 0, %v482
  %v484 = vrot.slane %v479, %v483
  %v486 = vmul.f32 %v478, %v484
  %487 = vadd.xlane.f32.xlu0 %v486
  %v488 = vpop.xlane.xlu0 %487
  %v489 = vld [vmem:[#allocation2] sm:$0x1]
  %v491 = vlaneseq
  %v492 = vshrl.u32 %v491, 7
  %v493 = vsub.s32 0, %v492
  %v494 = vrot.slane %v489, %v493
  %v496 = vadd.f32 %v488, %v494
  %vm497 = vcmask 7168
  %498 = vst.msk [vmem:[%s8] sm:$0xff] %vm497, %v496
  // Predicated region
  $region34: #{qnet_forward.1} parent=0 // pred_check
    _
  $region35: #{qnet_forward.1} parent=0 // pred_check_branch
    %500 = sbr.rel (0) target = $region37
  $region36: #{qnet_forward.1} parent=0 // pred_region
    _
  $region37: #{qnet_forward.1} parent=0 // pred_fallthru
    _
  // Predicated region
  $region38: #{qnet_forward.1} parent=0 // pred_check
    _
  $region39: #{qnet_forward.1} parent=0 // pred_check_branch
    %502 = sbr.rel (0) target = $region41
  $region40: #{qnet_forward.1} parent=0 // pred_region
    _
  $region41: #{qnet_forward.1} parent=0 // pred_fallthru
    _

</llo_original>
